<compile_context>
chip_gen: v7x
topology: tpu7x:2x2x1
jax: 0.10.0
libtpu: 0.0.40
codegen_flags: <defaults>
</compile_context>

<pallas_src>
import functools

import jax
import jax.numpy as jnp
from jax.experimental import pallas as pl
from jax.experimental.pallas import tpu as pltpu


# ------------------------------- fused kernel -------------------------------


def _decoder_step_kernel(num_layers, hidden_dim, *refs):
    """Fused decoder step: L GRU layers + Linear + LogSoftmax.

    refs layout (inputs then outputs):
      x_ref        : (B, E)  f32   embedded token (seq dim already squeezed)
      h_ref        : (L, B, H) f32 previous hidden state
      per layer l  : wih_l (in, 3H) bf16, whh_l (H, 3H) bf16,
                     b_i_l (1, 3H) f32 (r/z pre-summed, n = bih_n),
                     b_hn_l (1, H) f32 (bhh_n, gated by r)
      w_out        : (H, OUT) bf16
      b_out        : (1, OUT) f32
      predict_ref  : (B, OUT) f32  (output 0)
      hidden_out   : (L, B, H) f32 (output 1, aliased onto h_ref's buffer)
    """
    H = hidden_dim
    x_ref, h_ref = refs[0], refs[1]
    layer_refs = refs[2 : 2 + 4 * num_layers]
    w_out_ref = refs[2 + 4 * num_layers]
    b_out_ref = refs[3 + 4 * num_layers]
    predict_ref = refs[4 + 4 * num_layers]
    hidden_out_ref = refs[5 + 4 * num_layers]

    # TODO(synk): training-mode dropout (on the input and between GRU layers) is not
    # applied — module semantics are reproduced in eval mode where Dropout is identity.
    x = x_ref[...]                                           # (B, E) f32

    for layer in range(num_layers):
        wih_ref, whh_ref, b_i_ref, b_hn_ref = layer_refs[4 * layer : 4 * layer + 4]
        h = h_ref[layer]                                     # (B, H) f32

        # Two matmuls per layer: bf16 weights, f32 accumulation on the MXU.
        gi = jnp.dot(x.astype(jnp.bfloat16), wih_ref[...],
                     preferred_element_type=jnp.float32) + b_i_ref[...]
        gh = jnp.dot(h.astype(jnp.bfloat16), whh_ref[...],
                     preferred_element_type=jnp.float32)

        # PyTorch GRU gate equations (gates packed [r | z | n] along lanes).
        r = jax.nn.sigmoid(gi[:, 0:H] + gh[:, 0:H])
        z = jax.nn.sigmoid(gi[:, H:2 * H] + gh[:, H:2 * H])
        n = jnp.tanh(gi[:, 2 * H:3 * H] + r * (gh[:, 2 * H:3 * H] + b_hn_ref[...]))
        h_new = (1.0 - z) * n + z * h

        hidden_out_ref[layer] = h_new.astype(hidden_out_ref.dtype)
        x = h_new

    # Output projection + log-softmax (f32 math; exp/log go to the EUP).
    # TODO(synk): for realistic vocab sizes (>= 8k) tile w_out over the vocab dim with a
    # grid + online max/sum log-softmax to fit v7x's 64 MiB VMEM; whole-array VMEM is
    # fine for this small projection.
    logits = jnp.dot(x.astype(jnp.bfloat16), w_out_ref[...],
                     preferred_element_type=jnp.float32) + b_out_ref[...]
    m = jnp.max(logits, axis=-1, keepdims=True)
    shifted = logits - m
    lse = jnp.log(jnp.sum(jnp.exp(shifted), axis=-1, keepdims=True))
    predict_ref[...] = (shifted - lse).astype(predict_ref.dtype)


# ------------------------------- JAX wrapper ---------------------------------


def decoder_forward(embed, hidden, params):
    """embed: (B, 1, E) f32, hidden: (L, B, H) f32 -> (predict (B,OUT), hidden (L,B,H))."""
    B, S, E = embed.shape
    L, _, H = hidden.shape
    assert S == 1, "Decoder step expects seq_len == 1 (output.squeeze(1))"

    x = embed[:, 0, :]                                       # dropout = identity (eval)
    inputs = [x, hidden]
    for layer in range(L):
        inputs += [params[f"wih_{layer}"], params[f"whh_{layer}"],
                   params[f"b_i_{layer}"], params[f"b_hn_{layer}"]]
    inputs += [params["w_out"], params["b_out"]]
    OUT = params["w_out"].shape[1]

    # Advisory cost estimate for the XLA scheduler.
    flops = 0
    for layer in range(L):
        in_dim = E if layer == 0 else H
        flops += 2 * B * in_dim * 3 * H + 2 * B * H * 3 * H + 12 * B * H
    flops += 2 * B * H * OUT + 4 * B * OUT
    transcendentals = L * 3 * B * H + B * (OUT + 1)
    bytes_accessed = sum(int(a.size) * a.dtype.itemsize for a in inputs)
    bytes_accessed += B * OUT * 4 + L * B * H * 4

    vmem = pl.BlockSpec(memory_space=pltpu.MemorySpace.VMEM)
    kernel = functools.partial(_decoder_step_kernel, L, H)

    predict, hidden_out = pl.pallas_call(
        kernel,
        out_shape=(jax.ShapeDtypeStruct((B, OUT), jnp.float32),
                   jax.ShapeDtypeStruct((L, B, H), jnp.float32)),
        in_specs=[vmem] * len(inputs),
        out_specs=(vmem, vmem),
        input_output_aliases={1: 1},   # new hidden written over the old hidden buffer
        compiler_params=pltpu.CompilerParams(vmem_limit_bytes=32 * 1024 * 1024),
        cost_estimate=pl.CostEstimate(flops=flops,
                                      transcendentals=transcendentals,
                                      bytes_accessed=bytes_accessed),
    )(*inputs)
    return predict, hidden_out


# --------------------------- parameter construction --------------------------


def init_params(key, embed_dim, hidden_dim, layers, out_dim):
    """Build packed decoder params.

    PyTorch stores weight_ih_l{k}: (3H, in) with gates ordered [r, z, n]. Here each
    layer's gate weights are transposed and concatenated along lanes -> (in, 3H) bf16,
    and r/z biases are pre-summed (bih+bhh) while the n-gate hidden bias stays separate.
    """
    params = {}
    H = hidden_dim
    k = 1.0 / float(hidden_dim) ** 0.5
    keys = jax.random.split(key, 4 * layers + 2)
    ki = 0

    def u(shape):
        nonlocal ki
        v = jax.random.uniform(keys[ki], shape, jnp.float32, -k, k)
        ki += 1
        return v

    for layer in range(layers):
        in_dim = embed_dim if layer == 0 else hidden_dim
        w_ih = u((3, in_dim, H))      # [r, z, n], already "transposed" per gate
        w_hh = u((3, H, H))
        b_ih = u((3, H))
        b_hh = u((3, H))
        params[f"wih_{layer}"] = jnp.concatenate(
            [w_ih[0], w_ih[1], w_ih[2]], axis=1).astype(jnp.bfloat16)       # (in, 3H)
        params[f"whh_{layer}"] = jnp.concatenate(
            [w_hh[0], w_hh[1], w_hh[2]], axis=1).astype(jnp.bfloat16)       # (H, 3H)
        b_i = jnp.concatenate([b_ih[0] + b_hh[0], b_ih[1] + b_hh[1], b_ih[2]], axis=0)
        params[f"b_i_{layer}"] = b_i.reshape(1, 3 * H)                      # (1, 3H) f32
        params[f"b_hn_{layer}"] = b_hh[2].reshape(1, H)                     # (1, H)  f32

    # nn.Linear(hidden_dim, out_dim): weight (out, H) -> stored transposed (H, out) bf16.
    params["w_out"] = u((hidden_dim, out_dim)).astype(jnp.bfloat16)
    params["b_out"] = u((1, out_dim))
    return params


# ------------------------------ pure-JAX reference ---------------------------


def decoder_forward_ref(embed, hidden, params):
    """Reference using the same packed bf16 weights / f32 accumulation as the kernel."""
    x = embed[:, 0, :]
    L, _, H = hidden.shape
    new_hidden = []
    for layer in range(L):
        h = hidden[layer]
        wih, whh = params[f"wih_{layer}"], params[f"whh_{layer}"]
        b_i, b_hn = params[f"b_i_{layer}"], params[f"b_hn_{layer}"]
        gi = jnp.dot(x.astype(jnp.bfloat16), wih,
                     preferred_element_type=jnp.float32) + b_i
        gh = jnp.dot(h.astype(jnp.bfloat16), whh,
                     preferred_element_type=jnp.float32)
        r = jax.nn.sigmoid(gi[:, 0:H] + gh[:, 0:H])
        z = jax.nn.sigmoid(gi[:, H:2 * H] + gh[:, H:2 * H])
        n = jnp.tanh(gi[:, 2 * H:3 * H] + r * (gh[:, 2 * H:3 * H] + b_hn))
        h_new = (1.0 - z) * n + z * h
        new_hidden.append(h_new)
        x = h_new
    logits = jnp.dot(x.astype(jnp.bfloat16), params["w_out"],
                     preferred_element_type=jnp.float32) + params["b_out"]
    predict = jax.nn.log_softmax(logits, axis=1)
    return predict, jnp.stack(new_hidden, axis=0)


# ------------------------------------ main ------------------------------------


if __name__ == "__main__":
    B = 8        # batch
    E = 64       # embed_dim
    H = 128      # hidden_dim (lane-dense: multiple of 128)
    L = 2        # GRU layers
    OUT = 256    # out_dim / vocab (lane-dense: multiple of 128)

    root = jax.random.PRNGKey(0)
    k_param, k_embed, k_hidden = jax.random.split(root, 3)

    params = init_params(k_param, E, H, L, OUT)
    embed = jax.random.normal(k_embed, (B, 1, E), jnp.float32)
    hidden = jax.random.normal(k_hidden, (L, B, H), jnp.float32)

    # pure-JAX reference (computed first; kernel input buffers are not donated anyway)
    ref_predict, ref_hidden = decoder_forward_ref(embed, hidden, params)

    decoder_step = jax.jit(decoder_forward)
    predict, hidden_out = decoder_step(embed, hidden, params)
    predict = jax.block_until_ready(predict)
    hidden_out = jax.block_until_ready(hidden_out)

    assert predict.shape == (B, OUT)
    assert hidden_out.shape == (L, B, H)
    assert jnp.allclose(predict, ref_predict, atol=1e-4, rtol=1e-4)
    assert jnp.allclose(hidden_out, ref_hidden, atol=1e-4, rtol=1e-4)
    # log-softmax sanity: rows exponentiate to probability distributions
    assert jnp.allclose(jnp.sum(jnp.exp(predict), axis=1), 1.0, atol=1e-3)

    print("KERNEL_OK")
</pallas_src>

<mosaic_0001>
module attributes {stable_mosaic.version = 11 : i64} {
  func.func @_decoder_step_kernel(%arg0: memref<8x64xf32, #tpu.memory_space<vmem>>, %arg1: memref<2x8x128xf32, #tpu.memory_space<vmem>>, %arg2: memref<64x384xbf16, #tpu.memory_space<vmem>>, %arg3: memref<128x384xbf16, #tpu.memory_space<vmem>>, %arg4: memref<1x384xf32, #tpu.memory_space<vmem>>, %arg5: memref<1x128xf32, #tpu.memory_space<vmem>>, %arg6: memref<128x384xbf16, #tpu.memory_space<vmem>>, %arg7: memref<128x384xbf16, #tpu.memory_space<vmem>>, %arg8: memref<1x384xf32, #tpu.memory_space<vmem>>, %arg9: memref<1x128xf32, #tpu.memory_space<vmem>>, %arg10: memref<128x256xbf16, #tpu.memory_space<vmem>>, %arg11: memref<1x256xf32, #tpu.memory_space<vmem>>, %arg12: memref<8x256xf32, #tpu.memory_space<vmem>>, %arg13: memref<2x8x128xf32, #tpu.memory_space<vmem>>) attributes {dimension_semantics = [], scalar_prefetch = 0 : i64, scratch_operands = 0 : i64, tpu.core_type = #tpu.core_type<tc>} {
    %c0 = arith.constant 0 : index
    %c0_0 = arith.constant 0 : index
    %0 = vector.load %arg0[%c0, %c0_0] : memref<8x64xf32, #tpu.memory_space<vmem>>, vector<8x64xf32>
    %c0_1 = arith.constant 0 : index
    %c0_2 = arith.constant 0 : index
    %c0_3 = arith.constant 0 : index
    %1 = vector.load %arg1[%c0_1, %c0_2, %c0_3] : memref<2x8x128xf32, #tpu.memory_space<vmem>>, vector<1x8x128xf32>
    %2 = vector.shape_cast %1 : vector<1x8x128xf32> to vector<8x128xf32>
    %3 = arith.truncf %0 : vector<8x64xf32> to vector<8x64xbf16>
    %c0_4 = arith.constant 0 : index
    %c0_5 = arith.constant 0 : index
    %4 = vector.load %arg2[%c0_4, %c0_5] : memref<64x384xbf16, #tpu.memory_space<vmem>>, vector<64x384xbf16>
    %cst = arith.constant dense<0.000000e+00> : vector<8x384xf32>
    %5 = tpu.matmul %3, %4, %cst {dimension_numbers = #tpu.dot_dimension_numbers<[1], [0], [0], [1], [0, 0, 1, 1], [], []>} : vector<8x64xbf16>, vector<64x384xbf16>, vector<8x384xf32> -> vector<8x384xf32>
    %c0_6 = arith.constant 0 : index
    %c0_7 = arith.constant 0 : index
    %6 = vector.load %arg4[%c0_6, %c0_7] : memref<1x384xf32, #tpu.memory_space<vmem>>, vector<1x384xf32>
    %7 = vector.broadcast %6 : vector<1x384xf32> to vector<8x384xf32>
    %8 = arith.addf %5, %7 : vector<8x384xf32>
    %9 = arith.truncf %2 : vector<8x128xf32> to vector<8x128xbf16>
    %c0_8 = arith.constant 0 : index
    %c0_9 = arith.constant 0 : index
    %10 = vector.load %arg3[%c0_8, %c0_9] : memref<128x384xbf16, #tpu.memory_space<vmem>>, vector<128x384xbf16>
    %cst_10 = arith.constant dense<0.000000e+00> : vector<8x384xf32>
    %11 = tpu.matmul %9, %10, %cst_10 {dimension_numbers = #tpu.dot_dimension_numbers<[1], [0], [0], [1], [0, 0, 1, 1], [], []>} : vector<8x128xbf16>, vector<128x384xbf16>, vector<8x384xf32> -> vector<8x384xf32>
    %12 = vector.extract_strided_slice %8 {offsets = [0, 0], sizes = [8, 128], strides = [1, 1]} : vector<8x384xf32> to vector<8x128xf32>
    %13 = vector.extract_strided_slice %11 {offsets = [0, 0], sizes = [8, 128], strides = [1, 1]} : vector<8x384xf32> to vector<8x128xf32>
    %14 = arith.addf %12, %13 : vector<8x128xf32>
    %15 = arith.negf %14 : vector<8x128xf32>
    %16 = math.exp %15 : vector<8x128xf32>
    %cst_11 = arith.constant 1.000000e+00 : f32
    %17 = vector.broadcast %cst_11 : f32 to vector<8x128xf32>
    %18 = arith.addf %17, %16 : vector<8x128xf32>
    %19 = arith.divf %17, %18 : vector<8x128xf32>
    %20 = vector.extract_strided_slice %8 {offsets = [0, 128], sizes = [8, 128], strides = [1, 1]} : vector<8x384xf32> to vector<8x128xf32>
    %21 = vector.extract_strided_slice %11 {offsets = [0, 128], sizes = [8, 128], strides = [1, 1]} : vector<8x384xf32> to vector<8x128xf32>
    %22 = arith.addf %20, %21 : vector<8x128xf32>
    %23 = arith.negf %22 : vector<8x128xf32>
    %24 = math.exp %23 : vector<8x128xf32>
    %cst_12 = arith.constant 1.000000e+00 : f32
    %25 = vector.broadcast %cst_12 : f32 to vector<8x128xf32>
    %26 = arith.addf %25, %24 : vector<8x128xf32>
    %27 = arith.divf %25, %26 : vector<8x128xf32>
    %28 = vector.extract_strided_slice %8 {offsets = [0, 256], sizes = [8, 128], strides = [1, 1]} : vector<8x384xf32> to vector<8x128xf32>
    %29 = vector.extract_strided_slice %11 {offsets = [0, 256], sizes = [8, 128], strides = [1, 1]} : vector<8x384xf32> to vector<8x128xf32>
    %c0_13 = arith.constant 0 : index
    %c0_14 = arith.constant 0 : index
    %30 = vector.load %arg5[%c0_13, %c0_14] : memref<1x128xf32, #tpu.memory_space<vmem>>, vector<1x128xf32>
    %31 = vector.broadcast %30 : vector<1x128xf32> to vector<8x128xf32>
    %32 = arith.addf %29, %31 : vector<8x128xf32>
    %33 = arith.mulf %19, %32 : vector<8x128xf32>
    %34 = arith.addf %28, %33 : vector<8x128xf32>
    %35 = math.tanh %34 : vector<8x128xf32>
    %cst_15 = arith.constant 1.000000e+00 : f32
    %36 = vector.broadcast %cst_15 : f32 to vector<8x128xf32>
    %37 = arith.subf %36, %27 : vector<8x128xf32>
    %38 = arith.mulf %37, %35 : vector<8x128xf32>
    %39 = arith.mulf %27, %2 : vector<8x128xf32>
    %40 = arith.addf %38, %39 : vector<8x128xf32>
    %c0_16 = arith.constant 0 : index
    %c0_17 = arith.constant 0 : index
    %c0_18 = arith.constant 0 : index
    %41 = vector.load %arg13[%c0_16, %c0_17, %c0_18] : memref<2x8x128xf32, #tpu.memory_space<vmem>>, vector<1x8x128xf32>
    %42 = vector.shape_cast %41 : vector<1x8x128xf32> to vector<8x128xf32>
    %43 = vector.shape_cast %40 : vector<8x128xf32> to vector<1x8x128xf32>
    tpu.vector_store %arg13[%c0_16, %c0_17, %c0_18], %43 {strides = array<i32>} : memref<2x8x128xf32, #tpu.memory_space<vmem>>, vector<1x8x128xf32>,
    %c1 = arith.constant 1 : index
    %c0_19 = arith.constant 0 : index
    %c0_20 = arith.constant 0 : index
    %44 = vector.load %arg1[%c1, %c0_19, %c0_20] : memref<2x8x128xf32, #tpu.memory_space<vmem>>, vector<1x8x128xf32>
    %45 = vector.shape_cast %44 : vector<1x8x128xf32> to vector<8x128xf32>
    %46 = arith.truncf %40 : vector<8x128xf32> to vector<8x128xbf16>
    %c0_21 = arith.constant 0 : index
    %c0_22 = arith.constant 0 : index
    %47 = vector.load %arg6[%c0_21, %c0_22] : memref<128x384xbf16, #tpu.memory_space<vmem>>, vector<128x384xbf16>
    %cst_23 = arith.constant dense<0.000000e+00> : vector<8x384xf32>
    %48 = tpu.matmul %46, %47, %cst_23 {dimension_numbers = #tpu.dot_dimension_numbers<[1], [0], [0], [1], [0, 0, 1, 1], [], []>} : vector<8x128xbf16>, vector<128x384xbf16>, vector<8x384xf32> -> vector<8x384xf32>
    %c0_24 = arith.constant 0 : index
    %c0_25 = arith.constant 0 : index
    %49 = vector.load %arg8[%c0_24, %c0_25] : memref<1x384xf32, #tpu.memory_space<vmem>>, vector<1x384xf32>
    %50 = vector.broadcast %49 : vector<1x384xf32> to vector<8x384xf32>
    %51 = arith.addf %48, %50 : vector<8x384xf32>
    %52 = arith.truncf %45 : vector<8x128xf32> to vector<8x128xbf16>
    %c0_26 = arith.constant 0 : index
    %c0_27 = arith.constant 0 : index
    %53 = vector.load %arg7[%c0_26, %c0_27] : memref<128x384xbf16, #tpu.memory_space<vmem>>, vector<128x384xbf16>
    %cst_28 = arith.constant dense<0.000000e+00> : vector<8x384xf32>
    %54 = tpu.matmul %52, %53, %cst_28 {dimension_numbers = #tpu.dot_dimension_numbers<[1], [0], [0], [1], [0, 0, 1, 1], [], []>} : vector<8x128xbf16>, vector<128x384xbf16>, vector<8x384xf32> -> vector<8x384xf32>
    %55 = vector.extract_strided_slice %51 {offsets = [0, 0], sizes = [8, 128], strides = [1, 1]} : vector<8x384xf32> to vector<8x128xf32>
    %56 = vector.extract_strided_slice %54 {offsets = [0, 0], sizes = [8, 128], strides = [1, 1]} : vector<8x384xf32> to vector<8x128xf32>
    %57 = arith.addf %55, %56 : vector<8x128xf32>
    %58 = arith.negf %57 : vector<8x128xf32>
    %59 = math.exp %58 : vector<8x128xf32>
    %cst_29 = arith.constant 1.000000e+00 : f32
    %60 = vector.broadcast %cst_29 : f32 to vector<8x128xf32>
    %61 = arith.addf %60, %59 : vector<8x128xf32>
    %62 = arith.divf %60, %61 : vector<8x128xf32>
    %63 = vector.extract_strided_slice %51 {offsets = [0, 128], sizes = [8, 128], strides = [1, 1]} : vector<8x384xf32> to vector<8x128xf32>
    %64 = vector.extract_strided_slice %54 {offsets = [0, 128], sizes = [8, 128], strides = [1, 1]} : vector<8x384xf32> to vector<8x128xf32>
    %65 = arith.addf %63, %64 : vector<8x128xf32>
    %66 = arith.negf %65 : vector<8x128xf32>
    %67 = math.exp %66 : vector<8x128xf32>
    %cst_30 = arith.constant 1.000000e+00 : f32
    %68 = vector.broadcast %cst_30 : f32 to vector<8x128xf32>
    %69 = arith.addf %68, %67 : vector<8x128xf32>
    %70 = arith.divf %68, %69 : vector<8x128xf32>
    %71 = vector.extract_strided_slice %51 {offsets = [0, 256], sizes = [8, 128], strides = [1, 1]} : vector<8x384xf32> to vector<8x128xf32>
    %72 = vector.extract_strided_slice %54 {offsets = [0, 256], sizes = [8, 128], strides = [1, 1]} : vector<8x384xf32> to vector<8x128xf32>
    %c0_31 = arith.constant 0 : index
    %c0_32 = arith.constant 0 : index
    %73 = vector.load %arg9[%c0_31, %c0_32] : memref<1x128xf32, #tpu.memory_space<vmem>>, vector<1x128xf32>
    %74 = vector.broadcast %73 : vector<1x128xf32> to vector<8x128xf32>
    %75 = arith.addf %72, %74 : vector<8x128xf32>
    %76 = arith.mulf %62, %75 : vector<8x128xf32>
    %77 = arith.addf %71, %76 : vector<8x128xf32>
    %78 = math.tanh %77 : vector<8x128xf32>
    %cst_33 = arith.constant 1.000000e+00 : f32
    %79 = vector.broadcast %cst_33 : f32 to vector<8x128xf32>
    %80 = arith.subf %79, %70 : vector<8x128xf32>
    %81 = arith.mulf %80, %78 : vector<8x128xf32>
    %82 = arith.mulf %70, %45 : vector<8x128xf32>
    %83 = arith.addf %81, %82 : vector<8x128xf32>
    %c1_34 = arith.constant 1 : index
    %c0_35 = arith.constant 0 : index
    %c0_36 = arith.constant 0 : index
    %84 = vector.load %arg13[%c1_34, %c0_35, %c0_36] : memref<2x8x128xf32, #tpu.memory_space<vmem>>, vector<1x8x128xf32>
    %85 = vector.shape_cast %84 : vector<1x8x128xf32> to vector<8x128xf32>
    %86 = vector.shape_cast %83 : vector<8x128xf32> to vector<1x8x128xf32>
    tpu.vector_store %arg13[%c1_34, %c0_35, %c0_36], %86 {strides = array<i32>} : memref<2x8x128xf32, #tpu.memory_space<vmem>>, vector<1x8x128xf32>,
    %87 = arith.truncf %83 : vector<8x128xf32> to vector<8x128xbf16>
    %c0_37 = arith.constant 0 : index
    %c0_38 = arith.constant 0 : index
    %88 = vector.load %arg10[%c0_37, %c0_38] : memref<128x256xbf16, #tpu.memory_space<vmem>>, vector<128x256xbf16>
    %cst_39 = arith.constant dense<0.000000e+00> : vector<8x256xf32>
    %89 = tpu.matmul %87, %88, %cst_39 {dimension_numbers = #tpu.dot_dimension_numbers<[1], [0], [0], [1], [0, 0, 1, 1], [], []>} : vector<8x128xbf16>, vector<128x256xbf16>, vector<8x256xf32> -> vector<8x256xf32>
    %c0_40 = arith.constant 0 : index
    %c0_41 = arith.constant 0 : index
    %90 = vector.load %arg11[%c0_40, %c0_41] : memref<1x256xf32, #tpu.memory_space<vmem>>, vector<1x256xf32>
    %91 = vector.broadcast %90 : vector<1x256xf32> to vector<8x256xf32>
    %92 = arith.addf %89, %91 : vector<8x256xf32>
    %cst_42 = arith.constant dense<0xFF800000> : vector<8xf32>
    %93 = vector.multi_reduction <maximumf>, %92, %cst_42 [1] : vector<8x256xf32> to vector<8xf32>
    %94 = vector.shape_cast %93 : vector<8xf32> to vector<8x1xf32>
    %95 = vector.broadcast %94 : vector<8x1xf32> to vector<8x256xf32>
    %96 = arith.subf %92, %95 : vector<8x256xf32>
    %97 = math.exp %96 : vector<8x256xf32>
    %cst_43 = arith.constant dense<0.000000e+00> : vector<8xf32>
    %98 = vector.multi_reduction <add>, %97, %cst_43 [1] : vector<8x256xf32> to vector<8xf32>
    %99 = vector.shape_cast %98 : vector<8xf32> to vector<8x1xf32>
    %100 = math.log %99 : vector<8x1xf32>
    %101 = vector.broadcast %100 : vector<8x1xf32> to vector<8x256xf32>
    %102 = arith.subf %96, %101 : vector<8x256xf32>
    %c0_44 = arith.constant 0 : index
    %c0_45 = arith.constant 0 : index
    %103 = vector.load %arg12[%c0_44, %c0_45] : memref<8x256xf32, #tpu.memory_space<vmem>>, vector<8x256xf32>
    tpu.vector_store %arg12[%c0_44, %c0_45], %102 {strides = array<i32>} : memref<8x256xf32, #tpu.memory_space<vmem>>, vector<8x256xf32>,
    return
  }
}

</mosaic_0001>

<llo_original>
// kernel: decoder_forward.1
$region0: #{decoder_forward.1}
  #allocation0 [shape = 'u32[]', space=smem, size = 0x4, offset = 0x4, fixed_abs, tag = 'smem constant byte address 0x4 - core index']
  #allocation1 [shape = 'u32[144,128]{1,0:T(1,128)}', space=vmem, size = 0x12000, scoped, tag = 'internal scratch']
  %s0 = inlined_call_operand.vmem [shape: f32[8,64], index: 0, kind: input, shape index: {}]
  %s1 = inlined_call_operand.hbm [shape: f32[2,8,128], index: 1, kind: input, shape index: {}, may-alias: {1,13}]
  %s2 = inlined_call_operand.hbm [shape: bf16[64,384], index: 2, kind: input, shape index: {}]
  %s3 = inlined_call_operand.hbm [shape: bf16[128,384], index: 3, kind: input, shape index: {}]
  %s4 = inlined_call_operand.vmem [shape: f32[1,384], index: 4, kind: input, shape index: {}]
  %s5 = inlined_call_operand.vmem [shape: f32[1,128], index: 5, kind: input, shape index: {}]
  %s6 = inlined_call_operand.hbm [shape: bf16[128,384], index: 6, kind: input, shape index: {}]
  %s7 = inlined_call_operand.hbm [shape: bf16[128,384], index: 7, kind: input, shape index: {}]
  %s8 = inlined_call_operand.vmem [shape: f32[1,384], index: 8, kind: input, shape index: {}]
  %s9 = inlined_call_operand.vmem [shape: f32[1,128], index: 9, kind: input, shape index: {}]
  %s10 = inlined_call_operand.hbm [shape: bf16[128,256], index: 10, kind: input, shape index: {}]
  %s11 = inlined_call_operand.vmem [shape: f32[1,256], index: 11, kind: input, shape index: {}]
  %s12 = inlined_call_operand.hbm [shape: f32[8,256], index: 12, kind: output, shape index: {0}]
  %s13 = inlined_call_operand.hbm [shape: f32[2,8,128], index: 13, kind: output, shape index: {1}, may-alias: {1,13}]
  %14 = xla_tuple %s12, %s13
  %s15 = sld [smem:[#allocation0]]
  $region90: #{decoder_forward.1} parent=0
    _
  %s17 = ssub.s32 1, %s15
  %s18 = scalar_select 0, %s17, %s15
  $region1: #{decoder_forward.1} parent=0
    #allocation2 [shape = 'u8[8192]{0}', space=vmem, size = 0x2000, scoped, tag = 'input window, operand 1, single buffered']
    #allocation3 [shape = 's32[1]{0}', space=sflag, size = 0x4, scoped, tag = 'scoped memory for decoder_forward.1']
    #allocation4 [shape = 's32[1]{0}', space=sflag, size = 0x4, scoped, tag = 'scoped memory for decoder_forward.1']
    #allocation5 [shape = 'u8[49152]{0}', space=vmem, size = 0xc000, scoped, tag = 'input window, operand 2, single buffered']
    #allocation6 [shape = 's32[1]{0}', space=sflag, size = 0x4, scoped, tag = 'scoped memory for decoder_forward.1']
    #allocation7 [shape = 'u8[98304]{0}', space=vmem, size = 0x18000, scoped, tag = 'input window, operand 3, single buffered']
    #allocation8 [shape = 'u8[98304]{0}', space=vmem, size = 0x18000, scoped, tag = 'input window, operand 6, single buffered']
    #allocation9 [shape = 's32[1]{0}', space=sflag, size = 0x4, scoped, tag = 'scoped memory for decoder_forward.1']
    #allocation10 [shape = 'u8[98304]{0}', space=vmem, size = 0x18000, scoped, tag = 'input window, operand 7, single buffered']
    #allocation11 [shape = 'u8[65536]{0}', space=vmem, size = 0x10000, scoped, tag = 'input window, operand 10, single buffered']
    #allocation12 [shape = 's32[1]{0}', space=sflag, size = 0x4, scoped, tag = 'scoped memory for decoder_forward.1']
    #allocation13 [shape = 'u8[8192]{0}', space=vmem, size = 0x2000, scoped, tag = 'output window, operand 0, single buffered']
    #allocation14 [shape = 'u8[8192]{0}', space=vmem, size = 0x2000, scoped, tag = 'output window, operand 1, single buffered']
    #allocation15 [shape = 's32[1]{0}', space=sflag, size = 0x4, scoped, tag = 'scoped memory for decoder_forward.1']
    %19 = vsyncpa [#allocation3], 0
    %20 = vsyncpa [#allocation6], 0
    %21 = vsyncpa [#allocation9], 0
    %22 = vsyncpa [#allocation12], 0
    %23 = vsyncpa [#allocation4], 0
    %24 = vsyncpa [#allocation15], 0
    // Predicated region
    $region2: #{decoder_forward.1} parent=1 // pred_check
      _
    $region3: #{decoder_forward.1} parent=1 // pred_check_branch
      %26 = sbr.rel (0) target = $region5
    $region4: #{decoder_forward.1} parent=1 // pred_region
      _
    $region5: #{decoder_forward.1} parent=1 // pred_fallthru
      _
    // Predicated region
    $region6: #{decoder_forward.1} parent=1 // pred_check
      _
    $region7: #{decoder_forward.1} parent=1 // pred_check_branch
      %28 = sbr.rel (0) target = $region9
    $region8: #{decoder_forward.1} parent=1 // pred_region
      %s30 = ssub.s32 256, 256
      %31 = vsyncadd [#allocation3], %s30
      %s32 = sshll.u32 [#allocation2], 4
      %s33 = int_to_ptr.vmem [resolvable:$true] %s32
      %38 = dma.hbm_to_vmem [thread:$0]  %s1, 256, %s33, [#allocation3], 128, 128, 8
    $region9: #{decoder_forward.1} parent=1 // pred_fallthru
      _
    // Predicated region
    $region10: #{decoder_forward.1} parent=1 // pred_check
      _
    $region11: #{decoder_forward.1} parent=1 // pred_check_branch
      %40 = sbr.rel (0) target = $region13
    $region12: #{decoder_forward.1} parent=1 // pred_region
      %s42 = ssub.s32 1536, 1536
      %43 = vsyncadd [#allocation6], %s42
      %s44 = sshll.u32 [#allocation5], 4
      %s45 = int_to_ptr.vmem [resolvable:$true] %s44
      %50 = dma.hbm_to_vmem [thread:$0]  %s2, 1536, %s45, [#allocation6], 192, 192, 12
    $region13: #{decoder_forward.1} parent=1 // pred_fallthru
      _
    // Predicated region
    $region14: #{decoder_forward.1} parent=1 // pred_check
      _
    $region15: #{decoder_forward.1} parent=1 // pred_check_branch
      %52 = sbr.rel (0) target = $region17
    $region16: #{decoder_forward.1} parent=1 // pred_region
      %s54 = ssub.s32 3072, 3072
      %55 = vsyncadd [#allocation6], %s54
      %s56 = sshll.u32 [#allocation7], 4
      %s57 = int_to_ptr.vmem [resolvable:$true] %s56
      %62 = dma.hbm_to_vmem [thread:$0]  %s3, 3072, %s57, [#allocation6], 192, 192, 12
    $region17: #{decoder_forward.1} parent=1 // pred_fallthru
      _
    // Predicated region
    $region18: #{decoder_forward.1} parent=1 // pred_check
      _
    $region19: #{decoder_forward.1} parent=1 // pred_check_branch
      %64 = sbr.rel (0) target = $region21
    $region20: #{decoder_forward.1} parent=1 // pred_region
      _
    $region21: #{decoder_forward.1} parent=1 // pred_fallthru
      _
    // Predicated region
    $region22: #{decoder_forward.1} parent=1 // pred_check
      _
    $region23: #{decoder_forward.1} parent=1 // pred_check_branch
      %66 = sbr.rel (0) target = $region25
    $region24: #{decoder_forward.1} parent=1 // pred_region
      _
    $region25: #{decoder_forward.1} parent=1 // pred_fallthru
      _
    // Predicated region
    $region26: #{decoder_forward.1} parent=1 // pred_check
      _
    $region27: #{decoder_forward.1} parent=1 // pred_check_branch
      %68 = sbr.rel (0) target = $region29
    $region28: #{decoder_forward.1} parent=1 // pred_region
      %s70 = ssub.s32 3072, 3072
      %71 = vsyncadd [#allocation9], %s70
      %s72 = sshll.u32 [#allocation8], 4
      %s73 = int_to_ptr.vmem [resolvable:$true] %s72
      %78 = dma.hbm_to_vmem [thread:$0]  %s6, 3072, %s73, [#allocation9], 192, 192, 12
    $region29: #{decoder_forward.1} parent=1 // pred_fallthru
      _
    // Predicated region
    $region30: #{decoder_forward.1} parent=1 // pred_check
      _
    $region31: #{decoder_forward.1} parent=1 // pred_check_branch
      %80 = sbr.rel (0) target = $region33
    $region32: #{decoder_forward.1} parent=1 // pred_region
      %s82 = ssub.s32 3072, 3072
      %83 = vsyncadd [#allocation9], %s82
      %s84 = sshll.u32 [#allocation10], 4
      %s85 = int_to_ptr.vmem [resolvable:$true] %s84
      %90 = dma.hbm_to_vmem [thread:$0]  %s7, 3072, %s85, [#allocation9], 192, 192, 12
    $region33: #{decoder_forward.1} parent=1 // pred_fallthru
      _
    // Predicated region
    $region34: #{decoder_forward.1} parent=1 // pred_check
      _
    $region35: #{decoder_forward.1} parent=1 // pred_check_branch
      %92 = sbr.rel (0) target = $region37
    $region36: #{decoder_forward.1} parent=1 // pred_region
      _
    $region37: #{decoder_forward.1} parent=1 // pred_fallthru
      _
    // Predicated region
    $region38: #{decoder_forward.1} parent=1 // pred_check
      _
    $region39: #{decoder_forward.1} parent=1 // pred_check_branch
      %94 = sbr.rel (0) target = $region41
    $region40: #{decoder_forward.1} parent=1 // pred_region
      _
    $region41: #{decoder_forward.1} parent=1 // pred_fallthru
      _
    // Predicated region
    $region42: #{decoder_forward.1} parent=1 // pred_check
      _
    $region43: #{decoder_forward.1} parent=1 // pred_check_branch
      %96 = sbr.rel (0) target = $region45
    $region44: #{decoder_forward.1} parent=1 // pred_region
      %s98 = ssub.s32 2048, 2048
      %99 = vsyncadd [#allocation12], %s98
      %s100 = sshll.u32 [#allocation11], 4
      %s101 = int_to_ptr.vmem [resolvable:$true] %s100
      %106 = dma.hbm_to_vmem [thread:$0]  %s10, 2048, %s101, [#allocation12], 128, 128, 8
    $region45: #{decoder_forward.1} parent=1 // pred_fallthru
      _
    // Predicated region
    $region46: #{decoder_forward.1} parent=1 // pred_check
      _
    $region47: #{decoder_forward.1} parent=1 // pred_check_branch
      %108 = sbr.rel (0) target = $region49
    $region48: #{decoder_forward.1} parent=1 // pred_region
      _
    $region49: #{decoder_forward.1} parent=1 // pred_fallthru
      _
    // Predicated region
    $region50: #{decoder_forward.1} parent=1 // pred_check
      _
    $region51: #{decoder_forward.1} parent=1 // pred_check_branch
      %110 = sbr.rel (0) target = $region53
    $region52: #{decoder_forward.1} parent=1 // pred_region
      %111 = dma.done [#allocation3], 256
    $region53: #{decoder_forward.1} parent=1 // pred_fallthru
      _
    // Predicated region
    $region54: #{decoder_forward.1} parent=1 // pred_check
      _
    $region55: #{decoder_forward.1} parent=1 // pred_check_branch
      %113 = sbr.rel (0) target = $region57
    $region56: #{decoder_forward.1} parent=1 // pred_region
      %114 = dma.done [#allocation6], 1536
    $region57: #{decoder_forward.1} parent=1 // pred_fallthru
      _
    // Predicated region
    $region58: #{decoder_forward.1} parent=1 // pred_check
      _
    $region59: #{decoder_forward.1} parent=1 // pred_check_branch
      %116 = sbr.rel (0) target = $region61
    $region60: #{decoder_forward.1} parent=1 // pred_region
      %117 = dma.done [#allocation6], 3072
    $region61: #{decoder_forward.1} parent=1 // pred_fallthru
      _
    // Predicated region
    $region62: #{decoder_forward.1} parent=1 // pred_check
      _
    $region63: #{decoder_forward.1} parent=1 // pred_check_branch
      %119 = sbr.rel (0) target = $region65
    $region64: #{decoder_forward.1} parent=1 // pred_region
      %120 = dma.done [#allocation9], 3072
    $region65: #{decoder_forward.1} parent=1 // pred_fallthru
      _
    // Predicated region
    $region66: #{decoder_forward.1} parent=1 // pred_check
      _
    $region67: #{decoder_forward.1} parent=1 // pred_check_branch
      %122 = sbr.rel (0) target = $region69
    $region68: #{decoder_forward.1} parent=1 // pred_region
      %123 = dma.done [#allocation9], 3072
    $region69: #{decoder_forward.1} parent=1 // pred_fallthru
      _
    // Predicated region
    $region70: #{decoder_forward.1} parent=1 // pred_check
      _
    $region71: #{decoder_forward.1} parent=1 // pred_check_branch
      %125 = sbr.rel (0) target = $region73
    $region72: #{decoder_forward.1} parent=1 // pred_region
      %126 = dma.done [#allocation12], 2048
    $region73: #{decoder_forward.1} parent=1 // pred_fallthru
      _
    %v128 = vld [vmem:[%s0] sm:$0xff]
    %v129 = vld [vmem:[#allocation2] sm:$0xff]
    %v130 = vpack.c.bf16 %v128, %v128
    %v131 = vld [vmem:[#allocation5] sm:$0xff]
    %v132 = vld [vmem:[#allocation5 + $0x8] sm:$0xf]
    %v133 = vld [vmem:[#allocation5 + $0xc] sm:$0xff]
    %v134 = vld [vmem:[#allocation5 + $0x14] sm:$0xf]
    %v135 = vld [vmem:[#allocation5 + $0x18] sm:$0xff]
    %v136 = vld [vmem:[#allocation5 + $0x20] sm:$0xf]
    %v137 = vld [vmem:[#allocation5 + $0x24] sm:$0xff]
    %v138 = vld [vmem:[#allocation5 + $0x2c] sm:$0xf]
    %v139 = vld [vmem:[#allocation5 + $0x30] sm:$0xff]
    %v140 = vld [vmem:[#allocation5 + $0x38] sm:$0xf]
    %v141 = vld [vmem:[#allocation5 + $0x3c] sm:$0xff]
    %v142 = vld [vmem:[#allocation5 + $0x44] sm:$0xf]
    %v143 = vld [vmem:[#allocation5 + $0x48] sm:$0xff]
    %v144 = vld [vmem:[#allocation5 + $0x50] sm:$0xf]
    %v145 = vld [vmem:[#allocation5 + $0x54] sm:$0xff]
    %v146 = vld [vmem:[#allocation5 + $0x5c] sm:$0xf]
    %v147 = vld [vmem:[%s4] sm:$0x7]
    %v149 = vlaneseq
    %v150 = vshrl.u32 %v149, 7
    %v151 = vsub.s32 0, %v150
    %v152 = vrot.slane %v147, %v151
    %v153 = vlaneseq
    %v154 = vshrl.u32 %v153, 7
    %v155 = vsub.s32 1, %v154
    %v156 = vrot.slane %v147, %v155
    %v157 = vlaneseq
    %v158 = vshrl.u32 %v157, 7
    %v159 = vsub.s32 2, %v158
    %v160 = vrot.slane %v147, %v159
    %v180 = vunpack.c.l.b16 %v131
    %v181 = vunpack.c.h.b16 %v131
    %v182 = vunpack.c.l.b16 %v132
    %v183 = vunpack.c.l.b16 %v133
    %v184 = vunpack.c.h.b16 %v133
    %v185 = vunpack.c.l.b16 %v134
    %v186 = vunpack.c.l.b16 %v135
    %v187 = vunpack.c.h.b16 %v135
    %v188 = vunpack.c.l.b16 %v136
    %v189 = vunpack.c.l.b16 %v137
    %v190 = vunpack.c.h.b16 %v137
    %v191 = vunpack.c.l.b16 %v138
    %v192 = vunpack.c.l.b16 %v139
    %v193 = vunpack.c.h.b16 %v139
    %v194 = vunpack.c.l.b16 %v140
    %v195 = vunpack.c.l.b16 %v141
    %v196 = vunpack.c.h.b16 %v141
    %v197 = vunpack.c.l.b16 %v142
    %v198 = vunpack.c.l.b16 %v143
    %v199 = vunpack.c.h.b16 %v143
    %v200 = vunpack.c.l.b16 %v144
    %v201 = vunpack.c.l.b16 %v145
    %v202 = vunpack.c.h.b16 %v145
    %v203 = vunpack.c.l.b16 %v146
    %v204 = vpack.c.b16 %v183, %v180
    %v205 = vpack.c.b16 %v184, %v181
    %v206 = vpack.c.b16 %v185, %v182
    %v207 = vpack.c.b16 %v189, %v186
    %v208 = vpack.c.b16 %v190, %v187
    %v209 = vpack.c.b16 %v191, %v188
    %v210 = vpack.c.b16 %v195, %v192
    %v211 = vpack.c.b16 %v196, %v193
    %v212 = vpack.c.b16 %v197, %v194
    %v213 = vpack.c.b16 %v201, %v198
    %v214 = vpack.c.b16 %v202, %v199
    %v215 = vpack.c.b16 %v203, %v200
    %vm228 = vcmask 523264
    %v230 = vsel %vm228, %v130, 0
    %232 = vmatprep.subr.bf16.mxu0 %v205
    %233 = vmatpush1.bf16.msra.mxu0 %v204
    %234 = vmatprep.subr.bf16.mxu0 %v208
    %235 = vmatpush1.bf16.msra.mxu0 %v207
    %236 = vmatprep.subr.bf16.mxu0 %v211
    %237 = vmatpush1.bf16.msra.mxu0 %v210
    %238 = vmatprep.subr.bf16.mxu0 %v214
    %239 = vmatpush1.bf16.msra.mxu0 %v213
    %240 = vmatprep.subr.bf16.mxu0 0
    %241 = vmatpush1.bf16.msra.mxu0 0
    %242 = vmatprep.subr.bf16.mxu0 0
    %243 = vmatpush1.bf16.msra.mxu0 0
    %244 = vmatprep.subr.bf16.mxu0 0
    %245 = vmatpush1.bf16.msra.mxu0 0
    %246 = vmatprep.subr.bf16.mxu0 0
    %247 = vmatpush1.bf16.msra.mxu0 0
    %248 = vmatprep.subr.bf16.mxu0 0
    %249 = vmatpush1.bf16.msra.mxu0 0
    %250 = vmatprep.subr.bf16.mxu0 0
    %251 = vmatpush1.bf16.msra.mxu0 0
    %252 = vmatprep.subr.bf16.mxu0 0
    %253 = vmatpush1.bf16.msra.mxu0 0
    %254 = vmatprep.subr.bf16.mxu0 0
    %255 = vmatpush1.bf16.msra.mxu0 0
    %256 = vmatprep.subr.bf16.mxu0 0
    %257 = vmatpush1.bf16.msra.mxu0 0
    %258 = vmatprep.subr.bf16.mxu0 0
    %259 = vmatpush1.bf16.msra.mxu0 0
    %260 = vmatprep.subr.bf16.mxu0 0
    %261 = vmatpush1.bf16.msra.mxu0 0
    %262 = vmatprep.subr.bf16.mxu0 0
    %263 = vmatpush1.bf16.msra.mxu0 0
    %264 = vmatprep.mubr.bf16.mxu0 0
    %265 = vmatmul.mubr.bf16.gmra.mrb[0].mxu0 %v230
    %v266 = vpop.f32.mrb[0].mxu0
    %v267 = vadd.f32 %v152, %v266
    %v268 = vpop.f32.mrb[0].mxu0
    %v269 = vadd.f32 %v156, %v268
    %v270 = vpop.f32.mrb[0].mxu0
    %v271 = vpop.f32.mrb[0].mxu0
    %272 = vdwg.mxu0
    %273 = vmatprep.subr.bf16.mxu0 0
    %274 = vmatpush1.bf16.msra.mxu0 %v206
    %275 = vmatprep.subr.bf16.mxu0 0
    %276 = vmatpush1.bf16.msra.mxu0 %v209
    %277 = vmatprep.subr.bf16.mxu0 0
    %278 = vmatpush1.bf16.msra.mxu0 %v212
    %279 = vmatprep.subr.bf16.mxu0 0
    %280 = vmatpush1.bf16.msra.mxu0 %v215
    %281 = vmatprep.subr.bf16.mxu0 0
    %282 = vmatpush1.bf16.msra.mxu0 0
    %283 = vmatprep.subr.bf16.mxu0 0
    %284 = vmatpush1.bf16.msra.mxu0 0
    %285 = vmatprep.subr.bf16.mxu0 0
    %286 = vmatpush1.bf16.msra.mxu0 0
    %287 = vmatprep.subr.bf16.mxu0 0
    %288 = vmatpush1.bf16.msra.mxu0 0
    %289 = vmatprep.subr.bf16.mxu0 0
    %290 = vmatpush1.bf16.msra.mxu0 0
    %291 = vmatprep.subr.bf16.mxu0 0
    %292 = vmatpush1.bf16.msra.mxu0 0
    %293 = vmatprep.subr.bf16.mxu0 0
    %294 = vmatpush1.bf16.msra.mxu0 0
    %295 = vmatprep.subr.bf16.mxu0 0
    %296 = vmatpush1.bf16.msra.mxu0 0
    %297 = vmatprep.subr.bf16.mxu0 0
    %298 = vmatpush1.bf16.msra.mxu0 0
    %299 = vmatprep.subr.bf16.mxu0 0
    %300 = vmatpush1.bf16.msra.mxu0 0
    %301 = vmatprep.subr.bf16.mxu0 0
    %302 = vmatpush1.bf16.msra.mxu0 0
    %303 = vmatprep.subr.bf16.mxu0 0
    %304 = vmatpush1.bf16.msra.mxu0 0
    %305 = vmatprep.mubr.bf16.mxu0 0
    %306 = vmatmul.mubr.bf16.gmra.mrb[0].mxu0 %v230
    %v307 = vpop.f32.mrb[0].mxu0
    %v308 = vadd.f32 %v160, %v307
    %v309 = vpop.f32.mrb[0].mxu0
    %v310 = vpop.f32.mrb[0].mxu0
    %v311 = vpop.f32.mrb[0].mxu0
    %312 = vdwg.mxu0
    %v313 = vpack.c.bf16 %v129, %v129
    %v314 = vld [vmem:[#allocation7] sm:$0xff]
    %v315 = vld [vmem:[#allocation7 + $0x8] sm:$0xf]
    %v316 = vld [vmem:[#allocation7 + $0xc] sm:$0xff]
    %v317 = vld [vmem:[#allocation7 + $0x14] sm:$0xf]
    %v318 = vld [vmem:[#allocation7 + $0x18] sm:$0xff]
    %v319 = vld [vmem:[#allocation7 + $0x20] sm:$0xf]
    %v320 = vld [vmem:[#allocation7 + $0x24] sm:$0xff]
    %v321 = vld [vmem:[#allocation7 + $0x2c] sm:$0xf]
    %v322 = vld [vmem:[#allocation7 + $0x30] sm:$0xff]
    %v323 = vld [vmem:[#allocation7 + $0x38] sm:$0xf]
    %v324 = vld [vmem:[#allocation7 + $0x3c] sm:$0xff]
    %v325 = vld [vmem:[#allocation7 + $0x44] sm:$0xf]
    %v326 = vld [vmem:[#allocation7 + $0x48] sm:$0xff]
    %v327 = vld [vmem:[#allocation7 + $0x50] sm:$0xf]
    %v328 = vld [vmem:[#allocation7 + $0x54] sm:$0xff]
    %v329 = vld [vmem:[#allocation7 + $0x5c] sm:$0xf]
    %v330 = vld [vmem:[#allocation7 + $0x60] sm:$0xff]
    %v331 = vld [vmem:[#allocation7 + $0x68] sm:$0xf]
    %v332 = vld [vmem:[#allocation7 + $0x6c] sm:$0xff]
    %v333 = vld [vmem:[#allocation7 + $0x74] sm:$0xf]
    %v334 = vld [vmem:[#allocation7 + $0x78] sm:$0xff]
    %v335 = vld [vmem:[#allocation7 + $0x80] sm:$0xf]
    %v336 = vld [vmem:[#allocation7 + $0x84] sm:$0xff]
    %v337 = vld [vmem:[#allocation7 + $0x8c] sm:$0xf]
    %v338 = vld [vmem:[#allocation7 + $0x90] sm:$0xff]
    %v339 = vld [vmem:[#allocation7 + $0x98] sm:$0xf]
    %v340 = vld [vmem:[#allocation7 + $0x9c] sm:$0xff]
    %v341 = vld [vmem:[#allocation7 + $0xa4] sm:$0xf]
    %v342 = vld [vmem:[#allocation7 + $0xa8] sm:$0xff]
    %v343 = vld [vmem:[#allocation7 + $0xb0] sm:$0xf]
    %v344 = vld [vmem:[#allocation7 + $0xb4] sm:$0xff]
    %v345 = vld [vmem:[#allocation7 + $0xbc] sm:$0xf]
    %v378 = vunpack.c.l.b16 %v314
    %v379 = vunpack.c.h.b16 %v314
    %v380 = vunpack.c.l.b16 %v315
    %v381 = vunpack.c.l.b16 %v316
    %v382 = vunpack.c.h.b16 %v316
    %v383 = vunpack.c.l.b16 %v317
    %v384 = vunpack.c.l.b16 %v318
    %v385 = vunpack.c.h.b16 %v318
    %v386 = vunpack.c.l.b16 %v319
    %v387 = vunpack.c.l.b16 %v320
    %v388 = vunpack.c.h.b16 %v320
    %v389 = vunpack.c.l.b16 %v321
    %v390 = vunpack.c.l.b16 %v322
    %v391 = vunpack.c.h.b16 %v322
    %v392 = vunpack.c.l.b16 %v323
    %v393 = vunpack.c.l.b16 %v324
    %v394 = vunpack.c.h.b16 %v324
    %v395 = vunpack.c.l.b16 %v325
    %v396 = vunpack.c.l.b16 %v326
    %v397 = vunpack.c.h.b16 %v326
    %v398 = vunpack.c.l.b16 %v327
    %v399 = vunpack.c.l.b16 %v328
    %v400 = vunpack.c.h.b16 %v328
    %v401 = vunpack.c.l.b16 %v329
    %v402 = vunpack.c.l.b16 %v330
    %v403 = vunpack.c.h.b16 %v330
    %v404 = vunpack.c.l.b16 %v331
    %v405 = vunpack.c.l.b16 %v332
    %v406 = vunpack.c.h.b16 %v332
    %v407 = vunpack.c.l.b16 %v333
    %v408 = vunpack.c.l.b16 %v334
    %v409 = vunpack.c.h.b16 %v334
    %v410 = vunpack.c.l.b16 %v335
    %v411 = vunpack.c.l.b16 %v336
    %v412 = vunpack.c.h.b16 %v336
    %v413 = vunpack.c.l.b16 %v337
    %v414 = vunpack.c.l.b16 %v338
    %v415 = vunpack.c.h.b16 %v338
    %v416 = vunpack.c.l.b16 %v339
    %v417 = vunpack.c.l.b16 %v340
    %v418 = vunpack.c.h.b16 %v340
    %v419 = vunpack.c.l.b16 %v341
    %v420 = vunpack.c.l.b16 %v342
    %v421 = vunpack.c.h.b16 %v342
    %v422 = vunpack.c.l.b16 %v343
    %v423 = vunpack.c.l.b16 %v344
    %v424 = vunpack.c.h.b16 %v344
    %v425 = vunpack.c.l.b16 %v345
    %v426 = vpack.c.b16 %v381, %v378
    %v427 = vpack.c.b16 %v382, %v379
    %v428 = vpack.c.b16 %v383, %v380
    %v429 = vpack.c.b16 %v387, %v384
    %v430 = vpack.c.b16 %v388, %v385
    %v431 = vpack.c.b16 %v389, %v386
    %v432 = vpack.c.b16 %v393, %v390
    %v433 = vpack.c.b16 %v394, %v391
    %v434 = vpack.c.b16 %v395, %v392
    %v435 = vpack.c.b16 %v399, %v396
    %v436 = vpack.c.b16 %v400, %v397
    %v437 = vpack.c.b16 %v401, %v398
    %v438 = vpack.c.b16 %v405, %v402
    %v439 = vpack.c.b16 %v406, %v403
    %v440 = vpack.c.b16 %v407, %v404
    %v441 = vpack.c.b16 %v411, %v408
    %v442 = vpack.c.b16 %v412, %v409
    %v443 = vpack.c.b16 %v413, %v410
    %v444 = vpack.c.b16 %v417, %v414
    %v445 = vpack.c.b16 %v418, %v415
    %v446 = vpack.c.b16 %v419, %v416
    %v447 = vpack.c.b16 %v423, %v420
    %v448 = vpack.c.b16 %v424, %v421
    %v449 = vpack.c.b16 %v425, %v422
    %474 = vmatprep.subr.bf16.mxu0 %v427
    %475 = vmatpush1.bf16.msra.mxu0 %v426
    %476 = vmatprep.subr.bf16.mxu0 %v430
    %477 = vmatpush1.bf16.msra.mxu0 %v429
    %478 = vmatprep.subr.bf16.mxu0 %v433
    %479 = vmatpush1.bf16.msra.mxu0 %v432
    %480 = vmatprep.subr.bf16.mxu0 %v436
    %481 = vmatpush1.bf16.msra.mxu0 %v435
    %482 = vmatprep.subr.bf16.mxu0 %v439
    %483 = vmatpush1.bf16.msra.mxu0 %v438
    %484 = vmatprep.subr.bf16.mxu0 %v442
    %485 = vmatpush1.bf16.msra.mxu0 %v441
    %486 = vmatprep.subr.bf16.mxu0 %v445
    %487 = vmatpush1.bf16.msra.mxu0 %v444
    %488 = vmatprep.subr.bf16.mxu0 %v448
    %489 = vmatpush1.bf16.msra.mxu0 %v447
    %490 = vmatprep.subr.bf16.mxu0 0
    %491 = vmatpush1.bf16.msra.mxu0 0
    %492 = vmatprep.subr.bf16.mxu0 0
    %493 = vmatpush1.bf16.msra.mxu0 0
    %494 = vmatprep.subr.bf16.mxu0 0
    %495 = vmatpush1.bf16.msra.mxu0 0
    %496 = vmatprep.subr.bf16.mxu0 0
    %497 = vmatpush1.bf16.msra.mxu0 0
    %498 = vmatprep.subr.bf16.mxu0 0
    %499 = vmatpush1.bf16.msra.mxu0 0
    %500 = vmatprep.subr.bf16.mxu0 0
    %501 = vmatpush1.bf16.msra.mxu0 0
    %502 = vmatprep.subr.bf16.mxu0 0
    %503 = vmatpush1.bf16.msra.mxu0 0
    %504 = vmatprep.subr.bf16.mxu0 0
    %505 = vmatpush1.bf16.msra.mxu0 0
    %506 = vmatprep.mubr.bf16.mxu0 0
    %507 = vmatmul.mubr.bf16.gmra.mrb[0].mxu0 %v313
    %v508 = vpop.f32.mrb[0].mxu0
    %v509 = vadd.f32 0.0, %v508
    %v510 = vpop.f32.mrb[0].mxu0
    %v511 = vadd.f32 0.0, %v510
    %v512 = vpop.f32.mrb[0].mxu0
    %v513 = vpop.f32.mrb[0].mxu0
    %514 = vdwg.mxu0
    %515 = vmatprep.subr.bf16.mxu0 0
    %516 = vmatpush1.bf16.msra.mxu0 %v428
    %517 = vmatprep.subr.bf16.mxu0 0
    %518 = vmatpush1.bf16.msra.mxu0 %v431
    %519 = vmatprep.subr.bf16.mxu0 0
    %520 = vmatpush1.bf16.msra.mxu0 %v434
    %521 = vmatprep.subr.bf16.mxu0 0
    %522 = vmatpush1.bf16.msra.mxu0 %v437
    %523 = vmatprep.subr.bf16.mxu0 0
    %524 = vmatpush1.bf16.msra.mxu0 %v440
    %525 = vmatprep.subr.bf16.mxu0 0
    %526 = vmatpush1.bf16.msra.mxu0 %v443
    %527 = vmatprep.subr.bf16.mxu0 0
    %528 = vmatpush1.bf16.msra.mxu0 %v446
    %529 = vmatprep.subr.bf16.mxu0 0
    %530 = vmatpush1.bf16.msra.mxu0 %v449
    %531 = vmatprep.subr.bf16.mxu0 0
    %532 = vmatpush1.bf16.msra.mxu0 0
    %533 = vmatprep.subr.bf16.mxu0 0
    %534 = vmatpush1.bf16.msra.mxu0 0
    %535 = vmatprep.subr.bf16.mxu0 0
    %536 = vmatpush1.bf16.msra.mxu0 0
    %537 = vmatprep.subr.bf16.mxu0 0
    %538 = vmatpush1.bf16.msra.mxu0 0
    %539 = vmatprep.subr.bf16.mxu0 0
    %540 = vmatpush1.bf16.msra.mxu0 0
    %541 = vmatprep.subr.bf16.mxu0 0
    %542 = vmatpush1.bf16.msra.mxu0 0
    %543 = vmatprep.subr.bf16.mxu0 0
    %544 = vmatpush1.bf16.msra.mxu0 0
    %545 = vmatprep.subr.bf16.mxu0 0
    %546 = vmatpush1.bf16.msra.mxu0 0
    %547 = vmatprep.mubr.bf16.mxu0 0
    %548 = vmatmul.mubr.bf16.gmra.mrb[0].mxu0 %v313
    %v549 = vpop.f32.mrb[0].mxu0
    %v550 = vadd.f32 0.0, %v549
    %v551 = vpop.f32.mrb[0].mxu0
    %v552 = vpop.f32.mrb[0].mxu0
    %v553 = vpop.f32.mrb[0].mxu0
    %554 = vdwg.mxu0
    %v555 = vadd.f32 %v267, %v509
    %v556 = vxor.u32 %v555, 2147483648
    %v557 = vmul.f32 %v556, 1.442695
    %v558 = vpow.pop %v557
    %v559 = vadd.f32 %v558, 1.0
    %v560 = vrcp.pop %v559
    %v561 = vmul.f32 1.0, %v560
    %v562 = vadd.f32 %v269, %v511
    %v563 = vxor.u32 %v562, 2147483648
    %v564 = vmul.f32 %v563, 1.442695
    %v565 = vpow.pop %v564
    %v566 = vadd.f32 %v565, 1.0
    %v567 = vrcp.pop %v566
    %v568 = vmul.f32 1.0, %v567
    %v569 = vld [vmem:[%s5] sm:$0x1]
    %v571 = vlaneseq
    %v572 = vshrl.u32 %v571, 7
    %v573 = vsub.s32 0, %v572
    %v574 = vrot.slane %v569, %v573
    %v576 = vadd.f32 %v550, %v574
    %v577 = vmul.f32 %v561, %v576
    %v578 = vadd.f32 %v308, %v577
    %v579 = vtanh.pop %v578
    %v580 = vsub.f32 1.0, %v568
    %v581 = vmul.f32 %v580, %v579
    %v582 = vmul.f32 %v568, %v129
    %v583 = vadd.f32 %v581, %v582
    %584 = vst [vmem:[#allocation14] sm:$0xff] %v583
    %s585 = scalar_lea.vmem [#allocation2], 8
    %v586 = vld [vmem:[%s585] sm:$0xff]
    %v587 = vpack.c.bf16 %v583, %v583
    %v588 = vld [vmem:[#allocation8] sm:$0xff]
    %v589 = vld [vmem:[#allocation8 + $0x8] sm:$0xf]
    %v590 = vld [vmem:[#allocation8 + $0xc] sm:$0xff]
    %v591 = vld [vmem:[#allocation8 + $0x14] sm:$0xf]
    %v592 = vld [vmem:[#allocation8 + $0x18] sm:$0xff]
    %v593 = vld [vmem:[#allocation8 + $0x20] sm:$0xf]
    %v594 = vld [vmem:[#allocation8 + $0x24] sm:$0xff]
    %v595 = vld [vmem:[#allocation8 + $0x2c] sm:$0xf]
    %v596 = vld [vmem:[#allocation8 + $0x30] sm:$0xff]
    %v597 = vld [vmem:[#allocation8 + $0x38] sm:$0xf]
    %v598 = vld [vmem:[#allocation8 + $0x3c] sm:$0xff]
    %v599 = vld [vmem:[#allocation8 + $0x44] sm:$0xf]
    %v600 = vld [vmem:[#allocation8 + $0x48] sm:$0xff]
    %v601 = vld [vmem:[#allocation8 + $0x50] sm:$0xf]
    %v602 = vld [vmem:[#allocation8 + $0x54] sm:$0xff]
    %v603 = vld [vmem:[#allocation8 + $0x5c] sm:$0xf]
    %v604 = vld [vmem:[#allocation8 + $0x60] sm:$0xff]
    %v605 = vld [vmem:[#allocation8 + $0x68] sm:$0xf]
    %v606 = vld [vmem:[#allocation8 + $0x6c] sm:$0xff]
    %v607 = vld [vmem:[#allocation8 + $0x74] sm:$0xf]
    %v608 = vld [vmem:[#allocation8 + $0x78] sm:$0xff]
    %v609 = vld [vmem:[#allocation8 + $0x80] sm:$0xf]
    %v610 = vld [vmem:[#allocation8 + $0x84] sm:$0xff]
    %v611 = vld [vmem:[#allocation8 + $0x8c] sm:$0xf]
    %v612 = vld [vmem:[#allocation8 + $0x90] sm:$0xff]
    %v613 = vld [vmem:[#allocation8 + $0x98] sm:$0xf]
    %v614 = vld [vmem:[#allocation8 + $0x9c] sm:$0xff]
    %v615 = vld [vmem:[#allocation8 + $0xa4] sm:$0xf]
    %v616 = vld [vmem:[#allocation8 + $0xa8] sm:$0xff]
    %v617 = vld [vmem:[#allocation8 + $0xb0] sm:$0xf]
    %v618 = vld [vmem:[#allocation8 + $0xb4] sm:$0xff]
    %v619 = vld [vmem:[#allocation8 + $0xbc] sm:$0xf]
    %v620 = vld [vmem:[%s8] sm:$0x7]
    %v622 = vlaneseq
    %v623 = vshrl.u32 %v622, 7
    %v624 = vsub.s32 0, %v623
    %v625 = vrot.slane %v620, %v624
    %v626 = vlaneseq
    %v627 = vshrl.u32 %v626, 7
    %v628 = vsub.s32 1, %v627
    %v629 = vrot.slane %v620, %v628
    %v630 = vlaneseq
    %v631 = vshrl.u32 %v630, 7
    %v632 = vsub.s32 2, %v631
    %v633 = vrot.slane %v620, %v632
    %v669 = vunpack.c.l.b16 %v588
    %v670 = vunpack.c.h.b16 %v588
    %v671 = vunpack.c.l.b16 %v589
    %v672 = vunpack.c.l.b16 %v590
    %v673 = vunpack.c.h.b16 %v590
    %v674 = vunpack.c.l.b16 %v591
    %v675 = vunpack.c.l.b16 %v592
    %v676 = vunpack.c.h.b16 %v592
    %v677 = vunpack.c.l.b16 %v593
    %v678 = vunpack.c.l.b16 %v594
    %v679 = vunpack.c.h.b16 %v594
    %v680 = vunpack.c.l.b16 %v595
    %v681 = vunpack.c.l.b16 %v596
    %v682 = vunpack.c.h.b16 %v596
    %v683 = vunpack.c.l.b16 %v597
    %v684 = vunpack.c.l.b16 %v598
    %v685 = vunpack.c.h.b16 %v598
    %v686 = vunpack.c.l.b16 %v599
    %v687 = vunpack.c.l.b16 %v600
    %v688 = vunpack.c.h.b16 %v600
    %v689 = vunpack.c.l.b16 %v601
    %v690 = vunpack.c.l.b16 %v602
    %v691 = vunpack.c.h.b16 %v602
    %v692 = vunpack.c.l.b16 %v603
    %v693 = vunpack.c.l.b16 %v604
    %v694 = vunpack.c.h.b16 %v604
    %v695 = vunpack.c.l.b16 %v605
    %v696 = vunpack.c.l.b16 %v606
    %v697 = vunpack.c.h.b16 %v606
    %v698 = vunpack.c.l.b16 %v607
    %v699 = vunpack.c.l.b16 %v608
    %v700 = vunpack.c.h.b16 %v608
    %v701 = vunpack.c.l.b16 %v609
    %v702 = vunpack.c.l.b16 %v610
    %v703 = vunpack.c.h.b16 %v610
    %v704 = vunpack.c.l.b16 %v611
    %v705 = vunpack.c.l.b16 %v612
    %v706 = vunpack.c.h.b16 %v612
    %v707 = vunpack.c.l.b16 %v613
    %v708 = vunpack.c.l.b16 %v614
    %v709 = vunpack.c.h.b16 %v614
    %v710 = vunpack.c.l.b16 %v615
    %v711 = vunpack.c.l.b16 %v616
    %v712 = vunpack.c.h.b16 %v616
    %v713 = vunpack.c.l.b16 %v617
    %v714 = vunpack.c.l.b16 %v618
    %v715 = vunpack.c.h.b16 %v618
    %v716 = vunpack.c.l.b16 %v619
    %v717 = vpack.c.b16 %v672, %v669
    %v718 = vpack.c.b16 %v673, %v670
    %v719 = vpack.c.b16 %v674, %v671
    %v720 = vpack.c.b16 %v678, %v675
    %v721 = vpack.c.b16 %v679, %v676
    %v722 = vpack.c.b16 %v680, %v677
    %v723 = vpack.c.b16 %v684, %v681
    %v724 = vpack.c.b16 %v685, %v682
    %v725 = vpack.c.b16 %v686, %v683
    %v726 = vpack.c.b16 %v690, %v687
    %v727 = vpack.c.b16 %v691, %v688
    %v728 = vpack.c.b16 %v692, %v689
    %v729 = vpack.c.b16 %v696, %v693
    %v730 = vpack.c.b16 %v697, %v694
    %v731 = vpack.c.b16 %v698, %v695
    %v732 = vpack.c.b16 %v702, %v699
    %v733 = vpack.c.b16 %v703, %v700
    %v734 = vpack.c.b16 %v704, %v701
    %v735 = vpack.c.b16 %v708, %v705
    %v736 = vpack.c.b16 %v709, %v706
    %v737 = vpack.c.b16 %v710, %v707
    %v738 = vpack.c.b16 %v714, %v711
    %v739 = vpack.c.b16 %v715, %v712
    %v740 = vpack.c.b16 %v716, %v713
    %765 = vmatprep.subr.bf16.mxu0 %v718
    %766 = vmatpush1.bf16.msra.mxu0 %v717
    %767 = vmatprep.subr.bf16.mxu0 %v721
    %768 = vmatpush1.bf16.msra.mxu0 %v720
    %769 = vmatprep.subr.bf16.mxu0 %v724
    %770 = vmatpush1.bf16.msra.mxu0 %v723
    %771 = vmatprep.subr.bf16.mxu0 %v727
    %772 = vmatpush1.bf16.msra.mxu0 %v726
    %773 = vmatprep.subr.bf16.mxu0 %v730
    %774 = vmatpush1.bf16.msra.mxu0 %v729
    %775 = vmatprep.subr.bf16.mxu0 %v733
    %776 = vmatpush1.bf16.msra.mxu0 %v732
    %777 = vmatprep.subr.bf16.mxu0 %v736
    %778 = vmatpush1.bf16.msra.mxu0 %v735
    %779 = vmatprep.subr.bf16.mxu0 %v739
    %780 = vmatpush1.bf16.msra.mxu0 %v738
    %781 = vmatprep.subr.bf16.mxu0 0
    %782 = vmatpush1.bf16.msra.mxu0 0
    %783 = vmatprep.subr.bf16.mxu0 0
    %784 = vmatpush1.bf16.msra.mxu0 0
    %785 = vmatprep.subr.bf16.mxu0 0
    %786 = vmatpush1.bf16.msra.mxu0 0
    %787 = vmatprep.subr.bf16.mxu0 0
    %788 = vmatpush1.bf16.msra.mxu0 0
    %789 = vmatprep.subr.bf16.mxu0 0
    %790 = vmatpush1.bf16.msra.mxu0 0
    %791 = vmatprep.subr.bf16.mxu0 0
    %792 = vmatpush1.bf16.msra.mxu0 0
    %793 = vmatprep.subr.bf16.mxu0 0
    %794 = vmatpush1.bf16.msra.mxu0 0
    %795 = vmatprep.subr.bf16.mxu0 0
    %796 = vmatpush1.bf16.msra.mxu0 0
    %797 = vmatprep.mubr.bf16.mxu0 0
    %798 = vmatmul.mubr.bf16.gmra.mrb[0].mxu0 %v587
    %v799 = vpop.f32.mrb[0].mxu0
    %v800 = vadd.f32 %v625, %v799
    %v801 = vpop.f32.mrb[0].mxu0
    %v802 = vadd.f32 %v629, %v801
    %v803 = vpop.f32.mrb[0].mxu0
    %v804 = vpop.f32.mrb[0].mxu0
    %805 = vdwg.mxu0
    %806 = vmatprep.subr.bf16.mxu0 0
    %807 = vmatpush1.bf16.msra.mxu0 %v719
    %808 = vmatprep.subr.bf16.mxu0 0
    %809 = vmatpush1.bf16.msra.mxu0 %v722
    %810 = vmatprep.subr.bf16.mxu0 0
    %811 = vmatpush1.bf16.msra.mxu0 %v725
    %812 = vmatprep.subr.bf16.mxu0 0
    %813 = vmatpush1.bf16.msra.mxu0 %v728
    %814 = vmatprep.subr.bf16.mxu0 0
    %815 = vmatpush1.bf16.msra.mxu0 %v731
    %816 = vmatprep.subr.bf16.mxu0 0
    %817 = vmatpush1.bf16.msra.mxu0 %v734
    %818 = vmatprep.subr.bf16.mxu0 0
    %819 = vmatpush1.bf16.msra.mxu0 %v737
    %820 = vmatprep.subr.bf16.mxu0 0
    %821 = vmatpush1.bf16.msra.mxu0 %v740
    %822 = vmatprep.subr.bf16.mxu0 0
    %823 = vmatpush1.bf16.msra.mxu0 0
    %824 = vmatprep.subr.bf16.mxu0 0
    %825 = vmatpush1.bf16.msra.mxu0 0
    %826 = vmatprep.subr.bf16.mxu0 0
    %827 = vmatpush1.bf16.msra.mxu0 0
    %828 = vmatprep.subr.bf16.mxu0 0
    %829 = vmatpush1.bf16.msra.mxu0 0
    %830 = vmatprep.subr.bf16.mxu0 0
    %831 = vmatpush1.bf16.msra.mxu0 0
    %832 = vmatprep.subr.bf16.mxu0 0
    %833 = vmatpush1.bf16.msra.mxu0 0
    %834 = vmatprep.subr.bf16.mxu0 0
    %835 = vmatpush1.bf16.msra.mxu0 0
    %836 = vmatprep.subr.bf16.mxu0 0
    %837 = vmatpush1.bf16.msra.mxu0 0
    %838 = vmatprep.mubr.bf16.mxu0 0
    %839 = vmatmul.mubr.bf16.gmra.mrb[0].mxu0 %v587
    %v840 = vpop.f32.mrb[0].mxu0
    %v841 = vadd.f32 %v633, %v840
    %v842 = vpop.f32.mrb[0].mxu0
    %v843 = vpop.f32.mrb[0].mxu0
    %v844 = vpop.f32.mrb[0].mxu0
    %845 = vdwg.mxu0
    %v846 = vpack.c.bf16 %v586, %v586
    %v847 = vld [vmem:[#allocation10] sm:$0xff]
    %v848 = vld [vmem:[#allocation10 + $0x8] sm:$0xf]
    %v849 = vld [vmem:[#allocation10 + $0xc] sm:$0xff]
    %v850 = vld [vmem:[#allocation10 + $0x14] sm:$0xf]
    %v851 = vld [vmem:[#allocation10 + $0x18] sm:$0xff]
    %v852 = vld [vmem:[#allocation10 + $0x20] sm:$0xf]
    %v853 = vld [vmem:[#allocation10 + $0x24] sm:$0xff]
    %v854 = vld [vmem:[#allocation10 + $0x2c] sm:$0xf]
    %v855 = vld [vmem:[#allocation10 + $0x30] sm:$0xff]
    %v856 = vld [vmem:[#allocation10 + $0x38] sm:$0xf]
    %v857 = vld [vmem:[#allocation10 + $0x3c] sm:$0xff]
    %v858 = vld [vmem:[#allocation10 + $0x44] sm:$0xf]
    %v859 = vld [vmem:[#allocation10 + $0x48] sm:$0xff]
    %v860 = vld [vmem:[#allocation10 + $0x50] sm:$0xf]
    %v861 = vld [vmem:[#allocation10 + $0x54] sm:$0xff]
    %v862 = vld [vmem:[#allocation10 + $0x5c] sm:$0xf]
    %v863 = vld [vmem:[#allocation10 + $0x60] sm:$0xff]
    %v864 = vld [vmem:[#allocation10 + $0x68] sm:$0xf]
    %v865 = vld [vmem:[#allocation10 + $0x6c] sm:$0xff]
    %v866 = vld [vmem:[#allocation10 + $0x74] sm:$0xf]
    %v867 = vld [vmem:[#allocation10 + $0x78] sm:$0xff]
    %v868 = vld [vmem:[#allocation10 + $0x80] sm:$0xf]
    %v869 = vld [vmem:[#allocation10 + $0x84] sm:$0xff]
    %v870 = vld [vmem:[#allocation10 + $0x8c] sm:$0xf]
    %v871 = vld [vmem:[#allocation10 + $0x90] sm:$0xff]
    %v872 = vld [vmem:[#allocation10 + $0x98] sm:$0xf]
    %v873 = vld [vmem:[#allocation10 + $0x9c] sm:$0xff]
    %v874 = vld [vmem:[#allocation10 + $0xa4] sm:$0xf]
    %v875 = vld [vmem:[#allocation10 + $0xa8] sm:$0xff]
    %v876 = vld [vmem:[#allocation10 + $0xb0] sm:$0xf]
    %v877 = vld [vmem:[#allocation10 + $0xb4] sm:$0xff]
    %v878 = vld [vmem:[#allocation10 + $0xbc] sm:$0xf]
    %v911 = vunpack.c.l.b16 %v847
    %v912 = vunpack.c.h.b16 %v847
    %v913 = vunpack.c.l.b16 %v848
    %v914 = vunpack.c.l.b16 %v849
    %v915 = vunpack.c.h.b16 %v849
    %v916 = vunpack.c.l.b16 %v850
    %v917 = vunpack.c.l.b16 %v851
    %v918 = vunpack.c.h.b16 %v851
    %v919 = vunpack.c.l.b16 %v852
    %v920 = vunpack.c.l.b16 %v853
    %v921 = vunpack.c.h.b16 %v853
    %v922 = vunpack.c.l.b16 %v854
    %v923 = vunpack.c.l.b16 %v855
    %v924 = vunpack.c.h.b16 %v855
    %v925 = vunpack.c.l.b16 %v856
    %v926 = vunpack.c.l.b16 %v857
    %v927 = vunpack.c.h.b16 %v857
    %v928 = vunpack.c.l.b16 %v858
    %v929 = vunpack.c.l.b16 %v859
    %v930 = vunpack.c.h.b16 %v859
    %v931 = vunpack.c.l.b16 %v860
    %v932 = vunpack.c.l.b16 %v861
    %v933 = vunpack.c.h.b16 %v861
    %v934 = vunpack.c.l.b16 %v862
    %v935 = vunpack.c.l.b16 %v863
    %v936 = vunpack.c.h.b16 %v863
    %v937 = vunpack.c.l.b16 %v864
    %v938 = vunpack.c.l.b16 %v865
    %v939 = vunpack.c.h.b16 %v865
    %v940 = vunpack.c.l.b16 %v866
    %v941 = vunpack.c.l.b16 %v867
    %v942 = vunpack.c.h.b16 %v867
    %v943 = vunpack.c.l.b16 %v868
    %v944 = vunpack.c.l.b16 %v869
    %v945 = vunpack.c.h.b16 %v869
    %v946 = vunpack.c.l.b16 %v870
    %v947 = vunpack.c.l.b16 %v871
    %v948 = vunpack.c.h.b16 %v871
    %v949 = vunpack.c.l.b16 %v872
    %v950 = vunpack.c.l.b16 %v873
    %v951 = vunpack.c.h.b16 %v873
    %v952 = vunpack.c.l.b16 %v874
    %v953 = vunpack.c.l.b16 %v875
    %v954 = vunpack.c.h.b16 %v875
    %v955 = vunpack.c.l.b16 %v876
    %v956 = vunpack.c.l.b16 %v877
    %v957 = vunpack.c.h.b16 %v877
    %v958 = vunpack.c.l.b16 %v878
    %v959 = vpack.c.b16 %v914, %v911
    %v960 = vpack.c.b16 %v915, %v912
    %v961 = vpack.c.b16 %v916, %v913
    %v962 = vpack.c.b16 %v920, %v917
    %v963 = vpack.c.b16 %v921, %v918
    %v964 = vpack.c.b16 %v922, %v919
    %v965 = vpack.c.b16 %v926, %v923
    %v966 = vpack.c.b16 %v927, %v924
    %v967 = vpack.c.b16 %v928, %v925
    %v968 = vpack.c.b16 %v932, %v929
    %v969 = vpack.c.b16 %v933, %v930
    %v970 = vpack.c.b16 %v934, %v931
    %v971 = vpack.c.b16 %v938, %v935
    %v972 = vpack.c.b16 %v939, %v936
    %v973 = vpack.c.b16 %v940, %v937
    %v974 = vpack.c.b16 %v944, %v941
    %v975 = vpack.c.b16 %v945, %v942
    %v976 = vpack.c.b16 %v946, %v943
    %v977 = vpack.c.b16 %v950, %v947
    %v978 = vpack.c.b16 %v951, %v948
    %v979 = vpack.c.b16 %v952, %v949
    %v980 = vpack.c.b16 %v956, %v953
    %v981 = vpack.c.b16 %v957, %v954
    %v982 = vpack.c.b16 %v958, %v955
    %1007 = vmatprep.subr.bf16.mxu0 %v960
    %1008 = vmatpush1.bf16.msra.mxu0 %v959
    %1009 = vmatprep.subr.bf16.mxu0 %v963
    %1010 = vmatpush1.bf16.msra.mxu0 %v962
    %1011 = vmatprep.subr.bf16.mxu0 %v966
    %1012 = vmatpush1.bf16.msra.mxu0 %v965
    %1013 = vmatprep.subr.bf16.mxu0 %v969
    %1014 = vmatpush1.bf16.msra.mxu0 %v968
    %1015 = vmatprep.subr.bf16.mxu0 %v972
    %1016 = vmatpush1.bf16.msra.mxu0 %v971
    %1017 = vmatprep.subr.bf16.mxu0 %v975
    %1018 = vmatpush1.bf16.msra.mxu0 %v974
    %1019 = vmatprep.subr.bf16.mxu0 %v978
    %1020 = vmatpush1.bf16.msra.mxu0 %v977
    %1021 = vmatprep.subr.bf16.mxu0 %v981
    %1022 = vmatpush1.bf16.msra.mxu0 %v980
    %1023 = vmatprep.subr.bf16.mxu0 0
    %1024 = vmatpush1.bf16.msra.mxu0 0
    %1025 = vmatprep.subr.bf16.mxu0 0
    %1026 = vmatpush1.bf16.msra.mxu0 0
    %1027 = vmatprep.subr.bf16.mxu0 0
    %1028 = vmatpush1.bf16.msra.mxu0 0
    %1029 = vmatprep.subr.bf16.mxu0 0
    %1030 = vmatpush1.bf16.msra.mxu0 0
    %1031 = vmatprep.subr.bf16.mxu0 0
    %1032 = vmatpush1.bf16.msra.mxu0 0
    %1033 = vmatprep.subr.bf16.mxu0 0
    %1034 = vmatpush1.bf16.msra.mxu0 0
    %1035 = vmatprep.subr.bf16.mxu0 0
    %1036 = vmatpush1.bf16.msra.mxu0 0
    %1037 = vmatprep.subr.bf16.mxu0 0
    %1038 = vmatpush1.bf16.msra.mxu0 0
    %1039 = vmatprep.mubr.bf16.mxu0 0
    %1040 = vmatmul.mubr.bf16.gmra.mrb[0].mxu0 %v846
    %v1041 = vpop.f32.mrb[0].mxu0
    %v1042 = vadd.f32 0.0, %v1041
    %v1043 = vpop.f32.mrb[0].mxu0
    %v1044 = vadd.f32 0.0, %v1043
    %v1045 = vpop.f32.mrb[0].mxu0
    %v1046 = vpop.f32.mrb[0].mxu0
    %1047 = vdwg.mxu0
    %1048 = vmatprep.subr.bf16.mxu0 0
    %1049 = vmatpush1.bf16.msra.mxu0 %v961
    %1050 = vmatprep.subr.bf16.mxu0 0
    %1051 = vmatpush1.bf16.msra.mxu0 %v964
    %1052 = vmatprep.subr.bf16.mxu0 0
    %1053 = vmatpush1.bf16.msra.mxu0 %v967
    %1054 = vmatprep.subr.bf16.mxu0 0
    %1055 = vmatpush1.bf16.msra.mxu0 %v970
    %1056 = vmatprep.subr.bf16.mxu0 0
    %1057 = vmatpush1.bf16.msra.mxu0 %v973
    %1058 = vmatprep.subr.bf16.mxu0 0
    %1059 = vmatpush1.bf16.msra.mxu0 %v976
    %1060 = vmatprep.subr.bf16.mxu0 0
    %1061 = vmatpush1.bf16.msra.mxu0 %v979
    %1062 = vmatprep.subr.bf16.mxu0 0
    %1063 = vmatpush1.bf16.msra.mxu0 %v982
    %1064 = vmatprep.subr.bf16.mxu0 0
    %1065 = vmatpush1.bf16.msra.mxu0 0
    %1066 = vmatprep.subr.bf16.mxu0 0
    %1067 = vmatpush1.bf16.msra.mxu0 0
    %1068 = vmatprep.subr.bf16.mxu0 0
    %1069 = vmatpush1.bf16.msra.mxu0 0
    %1070 = vmatprep.subr.bf16.mxu0 0
    %1071 = vmatpush1.bf16.msra.mxu0 0
    %1072 = vmatprep.subr.bf16.mxu0 0
    %1073 = vmatpush1.bf16.msra.mxu0 0
    %1074 = vmatprep.subr.bf16.mxu0 0
    %1075 = vmatpush1.bf16.msra.mxu0 0
    %1076 = vmatprep.subr.bf16.mxu0 0
    %1077 = vmatpush1.bf16.msra.mxu0 0
    %1078 = vmatprep.subr.bf16.mxu0 0
    %1079 = vmatpush1.bf16.msra.mxu0 0
    %1080 = vmatprep.mubr.bf16.mxu0 0
    %1081 = vmatmul.mubr.bf16.gmra.mrb[0].mxu0 %v846
    %v1082 = vpop.f32.mrb[0].mxu0
    %v1083 = vadd.f32 0.0, %v1082
    %v1084 = vpop.f32.mrb[0].mxu0
    %v1085 = vpop.f32.mrb[0].mxu0
    %v1086 = vpop.f32.mrb[0].mxu0
    %1087 = vdwg.mxu0
    %v1088 = vadd.f32 %v800, %v1042
    %v1089 = vxor.u32 %v1088, 2147483648
    %v1090 = vmul.f32 %v1089, 1.442695
    %v1091 = vpow.pop %v1090
    %v1092 = vadd.f32 %v1091, 1.0
    %v1093 = vrcp.pop %v1092
    %v1094 = vmul.f32 1.0, %v1093
    %v1095 = vadd.f32 %v802, %v1044
    %v1096 = vxor.u32 %v1095, 2147483648
    %v1097 = vmul.f32 %v1096, 1.442695
    %v1098 = vpow.pop %v1097
    %v1099 = vadd.f32 %v1098, 1.0
    %v1100 = vrcp.pop %v1099
    %v1101 = vmul.f32 1.0, %v1100
    %v1102 = vld [vmem:[%s9] sm:$0x1]
    %v1104 = vlaneseq
    %v1105 = vshrl.u32 %v1104, 7
    %v1106 = vsub.s32 0, %v1105
    %v1107 = vrot.slane %v1102, %v1106
    %v1109 = vadd.f32 %v1083, %v1107
    %v1110 = vmul.f32 %v1094, %v1109
    %v1111 = vadd.f32 %v841, %v1110
    %v1112 = vtanh.pop %v1111
    %v1113 = vsub.f32 1.0, %v1101
    %v1114 = vmul.f32 %v1113, %v1112
    %v1115 = vmul.f32 %v1101, %v586
    %v1116 = vadd.f32 %v1114, %v1115
    %s1117 = scalar_lea.vmem [#allocation14], 8
    %1118 = vst [vmem:[%s1117] sm:$0xff] %v1116
    %v1119 = vpack.c.bf16 %v1116, %v1116
    %v1120 = vld [vmem:[#allocation11] sm:$0xff]
    %v1121 = vld [vmem:[#allocation11 + $0x8] sm:$0xff]
    %v1122 = vld [vmem:[#allocation11 + $0x10] sm:$0xff]
    %v1123 = vld [vmem:[#allocation11 + $0x18] sm:$0xff]
    %v1124 = vld [vmem:[#allocation11 + $0x20] sm:$0xff]
    %v1125 = vld [vmem:[#allocation11 + $0x28] sm:$0xff]
    %v1126 = vld [vmem:[#allocation11 + $0x30] sm:$0xff]
    %v1127 = vld [vmem:[#allocation11 + $0x38] sm:$0xff]
    %v1128 = vld [vmem:[#allocation11 + $0x40] sm:$0xff]
    %v1129 = vld [vmem:[#allocation11 + $0x48] sm:$0xff]
    %v1130 = vld [vmem:[#allocation11 + $0x50] sm:$0xff]
    %v1131 = vld [vmem:[#allocation11 + $0x58] sm:$0xff]
    %v1132 = vld [vmem:[#allocation11 + $0x60] sm:$0xff]
    %v1133 = vld [vmem:[#allocation11 + $0x68] sm:$0xff]
    %v1134 = vld [vmem:[#allocation11 + $0x70] sm:$0xff]
    %v1135 = vld [vmem:[#allocation11 + $0x78] sm:$0xff]
    %v1136 = vld [vmem:[%s11] sm:$0x3]
    %v1138 = vlaneseq
    %v1139 = vshrl.u32 %v1138, 7
    %v1140 = vsub.s32 0, %v1139
    %v1141 = vrot.slane %v1136, %v1140
    %v1142 = vlaneseq
    %v1143 = vshrl.u32 %v1142, 7
    %v1144 = vsub.s32 1, %v1143
    %v1145 = vrot.slane %v1136, %v1144
    %v1164 = vunpack.c.l.b16 %v1120
    %v1165 = vunpack.c.h.b16 %v1120
    %v1166 = vunpack.c.l.b16 %v1121
    %v1167 = vunpack.c.h.b16 %v1121
    %v1168 = vunpack.c.l.b16 %v1122
    %v1169 = vunpack.c.h.b16 %v1122
    %v1170 = vunpack.c.l.b16 %v1123
    %v1171 = vunpack.c.h.b16 %v1123
    %v1172 = vunpack.c.l.b16 %v1124
    %v1173 = vunpack.c.h.b16 %v1124
    %v1174 = vunpack.c.l.b16 %v1125
    %v1175 = vunpack.c.h.b16 %v1125
    %v1176 = vunpack.c.l.b16 %v1126
    %v1177 = vunpack.c.h.b16 %v1126
    %v1178 = vunpack.c.l.b16 %v1127
    %v1179 = vunpack.c.h.b16 %v1127
    %v1180 = vunpack.c.l.b16 %v1128
    %v1181 = vunpack.c.h.b16 %v1128
    %v1182 = vunpack.c.l.b16 %v1129
    %v1183 = vunpack.c.h.b16 %v1129
    %v1184 = vunpack.c.l.b16 %v1130
    %v1185 = vunpack.c.h.b16 %v1130
    %v1186 = vunpack.c.l.b16 %v1131
    %v1187 = vunpack.c.h.b16 %v1131
    %v1188 = vunpack.c.l.b16 %v1132
    %v1189 = vunpack.c.h.b16 %v1132
    %v1190 = vunpack.c.l.b16 %v1133
    %v1191 = vunpack.c.h.b16 %v1133
    %v1192 = vunpack.c.l.b16 %v1134
    %v1193 = vunpack.c.h.b16 %v1134
    %v1194 = vunpack.c.l.b16 %v1135
    %v1195 = vunpack.c.h.b16 %v1135
    %v1196 = vpack.c.b16 %v1166, %v1164
    %v1197 = vpack.c.b16 %v1167, %v1165
    %v1198 = vpack.c.b16 %v1170, %v1168
    %v1199 = vpack.c.b16 %v1171, %v1169
    %v1200 = vpack.c.b16 %v1174, %v1172
    %v1201 = vpack.c.b16 %v1175, %v1173
    %v1202 = vpack.c.b16 %v1178, %v1176
    %v1203 = vpack.c.b16 %v1179, %v1177
    %v1204 = vpack.c.b16 %v1182, %v1180
    %v1205 = vpack.c.b16 %v1183, %v1181
    %v1206 = vpack.c.b16 %v1186, %v1184
    %v1207 = vpack.c.b16 %v1187, %v1185
    %v1208 = vpack.c.b16 %v1190, %v1188
    %v1209 = vpack.c.b16 %v1191, %v1189
    %v1210 = vpack.c.b16 %v1194, %v1192
    %v1211 = vpack.c.b16 %v1195, %v1193
    %1228 = vmatprep.subr.bf16.mxu0 %v1197
    %1229 = vmatpush1.bf16.msra.mxu0 %v1196
    %1230 = vmatprep.subr.bf16.mxu0 %v1199
    %1231 = vmatpush1.bf16.msra.mxu0 %v1198
    %1232 = vmatprep.subr.bf16.mxu0 %v1201
    %1233 = vmatpush1.bf16.msra.mxu0 %v1200
    %1234 = vmatprep.subr.bf16.mxu0 %v1203
    %1235 = vmatpush1.bf16.msra.mxu0 %v1202
    %1236 = vmatprep.subr.bf16.mxu0 %v1205
    %1237 = vmatpush1.bf16.msra.mxu0 %v1204
    %1238 = vmatprep.subr.bf16.mxu0 %v1207
    %1239 = vmatpush1.bf16.msra.mxu0 %v1206
    %1240 = vmatprep.subr.bf16.mxu0 %v1209
    %1241 = vmatpush1.bf16.msra.mxu0 %v1208
    %1242 = vmatprep.subr.bf16.mxu0 %v1211
    %1243 = vmatpush1.bf16.msra.mxu0 %v1210
    %1244 = vmatprep.subr.bf16.mxu0 0
    %1245 = vmatpush1.bf16.msra.mxu0 0
    %1246 = vmatprep.subr.bf16.mxu0 0
    %1247 = vmatpush1.bf16.msra.mxu0 0
    %1248 = vmatprep.subr.bf16.mxu0 0
    %1249 = vmatpush1.bf16.msra.mxu0 0
    %1250 = vmatprep.subr.bf16.mxu0 0
    %1251 = vmatpush1.bf16.msra.mxu0 0
    %1252 = vmatprep.subr.bf16.mxu0 0
    %1253 = vmatpush1.bf16.msra.mxu0 0
    %1254 = vmatprep.subr.bf16.mxu0 0
    %1255 = vmatpush1.bf16.msra.mxu0 0
    %1256 = vmatprep.subr.bf16.mxu0 0
    %1257 = vmatpush1.bf16.msra.mxu0 0
    %1258 = vmatprep.subr.bf16.mxu0 0
    %1259 = vmatpush1.bf16.msra.mxu0 0
    %1260 = vmatprep.mubr.bf16.mxu0 0
    %1261 = vmatmul.mubr.bf16.gmra.mrb[0].mxu0 %v1119
    %v1262 = vpop.f32.mrb[0].mxu0
    %v1263 = vadd.f32 %v1141, %v1262
    %v1264 = vpop.f32.mrb[0].mxu0
    %v1265 = vadd.f32 %v1145, %v1264
    %v1266 = vpop.f32.mrb[0].mxu0
    %v1267 = vpop.f32.mrb[0].mxu0
    %1268 = vdwg.mxu0
    %v1269 = vmax.f32 %v1263, %v1265
    %1270 = vmax.xlane.f32.xlu0 %v1269
    %v1271 = vpop.xlane.xlu0 %1270
    %v1272 = vsub.f32 %v1263, %v1271
    %v1273 = vsub.f32 %v1265, %v1271
    %v1274 = vmul.f32 %v1272, 1.442695
    %v1275 = vpow.pop %v1274
    %v1276 = vmul.f32 %v1273, 1.442695
    %v1277 = vpow.pop %v1276
    %v1278 = vadd.f32 %v1275, %v1277
    %1279 = vadd.xlane.f32.xlu0 %v1278
    %v1280 = vpop.xlane.xlu0 %1279
    %v1281 = vlog2.pop %v1280
    %v1282 = vmul.f32 %v1281, 0.6931472
    %v1283 = vsub.f32 %v1272, %v1282
    %v1284 = vsub.f32 %v1273, %v1282
    %1285 = vst [vmem:[#allocation13] sm:$0xff] %v1283
    %1286 = vst [vmem:[#allocation13 + $0x8] sm:$0xff] %v1284
    // Predicated region
    $region74: #{decoder_forward.1} parent=1 // pred_check
      _
    $region75: #{decoder_forward.1} parent=1 // pred_check_branch
      %1288 = sbr.rel (0) target = $region77
    $region76: #{decoder_forward.1} parent=1 // pred_region
      %s1290 = ssub.s32 256, 256
      %1291 = vsyncadd [#allocation4], %s1290
      %s1293 = sshll.u32 [#allocation13], 4
      %s1294 = int_to_ptr.vmem [resolvable:$true] %s1293
      %1296 = dma.vmem_to_hbm [thread:$0]  %s1294, 256, %s12, [#allocation4]
    $region77: #{decoder_forward.1} parent=1 // pred_fallthru
      _
    // Predicated region
    $region78: #{decoder_forward.1} parent=1 // pred_check
      _
    $region79: #{decoder_forward.1} parent=1 // pred_check_branch
      %1298 = sbr.rel (0) target = $region81
    $region80: #{decoder_forward.1} parent=1 // pred_region
      %s1300 = ssub.s32 256, 256
      %1301 = vsyncadd [#allocation15], %s1300
      %s1302 = sshll.u32 [#allocation14], 4
      %s1303 = int_to_ptr.vmem [resolvable:$true] %s1302
      %1308 = dma.vmem_to_hbm [thread:$0]  %s1303, 256, %s13, [#allocation15], 128, 128, 8
    $region81: #{decoder_forward.1} parent=1 // pred_fallthru
      _
    // Predicated region
    $region82: #{decoder_forward.1} parent=1 // pred_check
      _
    $region83: #{decoder_forward.1} parent=1 // pred_check_branch
      %1310 = sbr.rel (0) target = $region85
    $region84: #{decoder_forward.1} parent=1 // pred_region
      %1311 = dma.done [#allocation4], 256
    $region85: #{decoder_forward.1} parent=1 // pred_fallthru
      _
    // Predicated region
    $region86: #{decoder_forward.1} parent=1 // pred_check
      _
    $region87: #{decoder_forward.1} parent=1 // pred_check_branch
      %1313 = sbr.rel (0) target = $region89
    $region88: #{decoder_forward.1} parent=1 // pred_region
      %1314 = dma.done [#allocation15], 256
    $region89: #{decoder_forward.1} parent=1 // pred_fallthru
      _
    %1315 = vsyncpa [#allocation3], 1
    %1316 = vsyncpa [#allocation6], 1
    %1317 = vsyncpa [#allocation9], 1
    %1318 = vsyncpa [#allocation12], 1
    %1319 = vsyncpa [#allocation4], 1
    %1320 = vsyncpa [#allocation15], 1

</llo_original>
